<compile_context>
chip_gen: v7x
topology: tpu7x:2x2x1
jax: 0.10.0
libtpu: 0.0.40
codegen_flags: <defaults>
</compile_context>

<pallas_src>
import functools

import jax
import jax.numpy as jnp
from jax.experimental import pallas as pl
from jax.experimental.pallas import tpu as pltpu


def _lstm_cell_kernel(*refs, apply_dropout, drop_threshold, keep_scale):
    if apply_dropout:
        (x_ref, hh_ref, c_ref, w_ref, b_ref, bits_ref,
         hh_out_ref, c_out_ref) = refs
    else:
        (x_ref, hh_ref, c_ref, w_ref, b_ref,
         hh_out_ref, c_out_ref) = refs
        bits_ref = None

    D = x_ref.shape[1]
    h = hh_ref.shape[1]

    # Two MXU matmuls into one f32 accumulator == dot([x|hh], W) without the
    # HBM concat.  Rows [0:D) of W multiply x, rows [D:D+h) multiply hh.
    gates = (
        jnp.dot(x_ref[...], w_ref[:D, :], preferred_element_type=jnp.float32)
        + jnp.dot(hh_ref[...], w_ref[D:, :], preferred_element_type=jnp.float32)
        + b_ref[...].astype(jnp.float32))

    # Gate order [i, f, o, g]; lane-dense when h % 128 == 0.
    i_g = jax.nn.sigmoid(gates[:, 0 * h:1 * h])
    f_g = jax.nn.sigmoid(gates[:, 1 * h:2 * h])
    o_g = jax.nn.sigmoid(gates[:, 2 * h:3 * h])
    g_g = jnp.tanh(gates[:, 3 * h:4 * h])

    if apply_dropout:
        # Inverted dropout on g: keep iff bits >= p * 2^32 (single uint32
        # compare; no shift / int->float convert on the VALU slots).
        keep = bits_ref[...] >= jnp.uint32(drop_threshold)
        g_g = jnp.where(keep, g_g * jnp.float32(keep_scale), 0.0)

    c_new = c_ref[...].astype(jnp.float32) * f_g + g_g * i_g
    hh_new = jnp.tanh(c_new) * o_g

    hh_out_ref[...] = hh_new.astype(hh_out_ref.dtype)
    c_out_ref[...] = c_new.astype(c_out_ref.dtype)


def lstm_cell_layer(x, s, params, *, gate_drop, trainable, rng_key=None,
                    block_b=None):
    """Pallas implementation of LSTMCellLayer.forward.

    x: (B, embedDim); s = (hh, c), each (B, h).
    params = (W, b) with W: (embedDim + h, 4h)  [transposed nn.Linear weight],
             b: (4h,).
    rng_key: required when trainable and gate_drop > 0 (dropout mask source).
    Returns (hh_new, (hh_new, c_new)), exactly like the PyTorch module.
    """
    hh, c = s
    W, b = params
    B, D = x.shape
    h = hh.shape[1]
    assert W.shape == (D + h, 4 * h) and b.shape == (4 * h,)
    assert hh.shape == (B, h) and c.shape == (B, h)

    apply_dropout = bool(trainable) and float(gate_drop) > 0.0

    # Batch tiling: one "parallel" grid axis over batch tiles (2 TCs on v7x).
    if block_b is None:
        block_b = B if B <= 512 else 512
    TB = block_b
    grid = (pl.cdiv(B, TB),)

    def row_spec(cols):
        return pl.BlockSpec((TB, cols), lambda i: (i, 0))

    b2 = b.reshape(1, 4 * h)

    in_specs = [
        row_spec(D),                                      # x
        row_spec(h),                                      # hh
        row_spec(h),                                      # c
        pl.BlockSpec((D + h, 4 * h), lambda i: (0, 0)),   # W (VMEM-resident)
        pl.BlockSpec((1, 4 * h), lambda i: (0, 0)),       # b (VMEM-resident)
    ]
    args = [x, hh, c, W, b2]

    drop_threshold = 0
    keep_scale = 1.0
    if apply_dropout:
        if rng_key is None:
            raise ValueError("rng_key required when trainable and gate_drop > 0")
        bits = jax.random.bits(rng_key, (B, h), dtype=jnp.uint32)
        drop_threshold = min(int(round(float(gate_drop) * (1 << 32))),
                             (1 << 32) - 1)
        keep_scale = 1.0 / (1.0 - float(gate_drop))
        in_specs.append(row_spec(h))                      # dropout bits
        args.append(bits)

    kernel = functools.partial(
        _lstm_cell_kernel, apply_dropout=apply_dropout,
        drop_threshold=drop_threshold, keep_scale=keep_scale)

    hh_new, c_new = pl.pallas_call(
        kernel,
        grid=grid,
        out_shape=(jax.ShapeDtypeStruct((B, h), hh.dtype),
                   jax.ShapeDtypeStruct((B, h), c.dtype)),
        in_specs=in_specs,
        out_specs=(row_spec(h), row_spec(h)),
        compiler_params=pltpu.CompilerParams(
            dimension_semantics=("parallel",)),
    )(*args)

    return hh_new, (hh_new, c_new)


def _reference(x, s, params, *, gate_drop=0.0, keep_mask=None):
    # Pure-JAX reference (f32) for correctness checks.
    hh, c = s
    W, b = params
    h = hh.shape[1]
    gates = (jnp.concatenate([x, hh], axis=1).astype(jnp.float32)
             @ W.astype(jnp.float32) + b.astype(jnp.float32))
    i_g = jax.nn.sigmoid(gates[:, 0 * h:1 * h])
    f_g = jax.nn.sigmoid(gates[:, 1 * h:2 * h])
    o_g = jax.nn.sigmoid(gates[:, 2 * h:3 * h])
    g_g = jnp.tanh(gates[:, 3 * h:4 * h])
    if keep_mask is not None:
        g_g = jnp.where(keep_mask, g_g / (1.0 - gate_drop), 0.0)
    c_new = c.astype(jnp.float32) * f_g + g_g * i_g
    hh_new = jnp.tanh(c_new) * o_g
    return hh_new, c_new


if __name__ == "__main__":
    # Small shapes consistent with the module; h is a multiple of 128 so the
    # gate slices and (B, h) outputs are lane-dense.
    B, embed_dim, h = 8, 128, 128
    gate_drop = 0.1

    key = jax.random.PRNGKey(0)
    kx, kh, kc, kw, kb, kd = jax.random.split(key, 6)

    x = jax.random.normal(kx, (B, embed_dim), dtype=jnp.float32)
    hh0 = jax.random.normal(kh, (B, h), dtype=jnp.float32)
    c0 = jax.random.normal(kc, (B, h), dtype=jnp.float32)

    # nn.Linear-style init: U(-bound, bound), bound = 1/sqrt(fan_in).
    fan_in = embed_dim + h
    bound = 1.0 / float(fan_in) ** 0.5
    W = jax.random.uniform(kw, (fan_in, 4 * h), jnp.float32, -bound, bound)
    b = jax.random.uniform(kb, (4 * h,), jnp.float32, -bound, bound)

    # 1) Eval mode (trainable=False, no dropout), f32 — exact check.
    hh_new, (hh_state, c_new) = lstm_cell_layer(
        x, (hh0, c0), (W, b), gate_drop=gate_drop, trainable=False)
    jax.block_until_ready((hh_new, c_new))
    hh_ref, c_ref = _reference(x, (hh0, c0), (W, b))
    assert jnp.allclose(hh_new, hh_ref, atol=1e-5, rtol=1e-5)
    assert jnp.allclose(c_new, c_ref, atol=1e-5, rtol=1e-5)

    # 2) Train mode with dropout: kernel and reference use the same streamed
    #    uint32 bits, so results match bit-for-bit in semantics.
    bits = jax.random.bits(kd, (B, h), dtype=jnp.uint32)
    threshold = min(int(round(gate_drop * (1 << 32))), (1 << 32) - 1)
    keep_mask = bits >= jnp.uint32(threshold)
    hh_t, (_, c_t) = lstm_cell_layer(
        x, (hh0, c0), (W, b), gate_drop=gate_drop, trainable=True, rng_key=kd)
    jax.block_until_ready((hh_t, c_t))
    hh_tr, c_tr = _reference(x, (hh0, c0), (W, b),
                             gate_drop=gate_drop, keep_mask=keep_mask)
    assert jnp.allclose(hh_t, hh_tr, atol=1e-5, rtol=1e-5)
    assert jnp.allclose(c_t, c_tr, atol=1e-5, rtol=1e-5)

    # 3) bf16 weights/activations (half the W DMA bytes, 2x MXU on v6e/v7x);
    #    f32 accumulation inside the kernel, loose tolerance vs f32 reference.
    hh_b, (_, c_b) = lstm_cell_layer(
        x.astype(jnp.bfloat16), (hh0.astype(jnp.bfloat16), c0),
        (W.astype(jnp.bfloat16), b), gate_drop=gate_drop, trainable=False)
    jax.block_until_ready((hh_b, c_b))
    assert jnp.allclose(hh_b.astype(jnp.float32), hh_ref, atol=5e-2)
    assert jnp.allclose(c_b.astype(jnp.float32), c_ref, atol=5e-2)

    print("KERNEL_OK")
</pallas_src>

<mosaic_0001>
module attributes {stable_mosaic.version = 11 : i64} {
  func.func @_lstm_cell_kernel(%arg0: i32, %arg1: memref<8x128xf32, #tpu.memory_space<vmem>>, %arg2: memref<8x128xf32, #tpu.memory_space<vmem>>, %arg3: memref<8x128xf32, #tpu.memory_space<vmem>>, %arg4: memref<256x512xf32, #tpu.memory_space<vmem>>, %arg5: memref<1x512xf32, #tpu.memory_space<vmem>>, %arg6: memref<8x128xf32, #tpu.memory_space<vmem>>, %arg7: memref<8x128xf32, #tpu.memory_space<vmem>>) attributes {dimension_semantics = [#tpu.dimension_semantics<parallel>], iteration_bounds = array<i64: 1>, scalar_prefetch = 0 : i64, scratch_operands = 0 : i64, tpu.core_type = #tpu.core_type<tc>, window_params = [{transform_indices = @transform_0, window_bounds = array<i64: 8, 128>}, {transform_indices = @transform_1, window_bounds = array<i64: 8, 128>}, {transform_indices = @transform_2, window_bounds = array<i64: 8, 128>}, {pipeline_mode = #tpu.pipeline_mode<synchronous>, transform_indices = @transform_3, window_bounds = array<i64: 256, 512>}, {pipeline_mode = #tpu.pipeline_mode<synchronous>, transform_indices = @transform_4, window_bounds = array<i64: 1, 512>}, {transform_indices = @transform_5, window_bounds = array<i64: 8, 128>}, {transform_indices = @transform_6, window_bounds = array<i64: 8, 128>}]} {
    %c0 = arith.constant 0 : index
    %c0_0 = arith.constant 0 : index
    %0 = vector.load %arg1[%c0, %c0_0] : memref<8x128xf32, #tpu.memory_space<vmem>>, vector<8x128xf32>
    %c0_1 = arith.constant 0 : index
    %c0_2 = arith.constant 0 : index
    %1 = vector.load %arg4[%c0_1, %c0_2] : memref<256x512xf32, #tpu.memory_space<vmem>>, vector<128x512xf32>
    %cst = arith.constant dense<0.000000e+00> : vector<8x512xf32>
    %2 = tpu.matmul %0, %1, %cst {dimension_numbers = #tpu.dot_dimension_numbers<[1], [0], [0], [1], [0, 0, 1, 1], [], []>} : vector<8x128xf32>, vector<128x512xf32>, vector<8x512xf32> -> vector<8x512xf32>
    %c0_3 = arith.constant 0 : index
    %c0_4 = arith.constant 0 : index
    %3 = vector.load %arg2[%c0_3, %c0_4] : memref<8x128xf32, #tpu.memory_space<vmem>>, vector<8x128xf32>
    %c128 = arith.constant 128 : index
    %c0_5 = arith.constant 0 : index
    %4 = vector.load %arg4[%c128, %c0_5] : memref<256x512xf32, #tpu.memory_space<vmem>>, vector<128x512xf32>
    %cst_6 = arith.constant dense<0.000000e+00> : vector<8x512xf32>
    %5 = tpu.matmul %3, %4, %cst_6 {dimension_numbers = #tpu.dot_dimension_numbers<[1], [0], [0], [1], [0, 0, 1, 1], [], []>} : vector<8x128xf32>, vector<128x512xf32>, vector<8x512xf32> -> vector<8x512xf32>
    %6 = arith.addf %2, %5 : vector<8x512xf32>
    %c0_7 = arith.constant 0 : index
    %c0_8 = arith.constant 0 : index
    %7 = vector.load %arg5[%c0_7, %c0_8] : memref<1x512xf32, #tpu.memory_space<vmem>>, vector<1x512xf32>
    %8 = vector.broadcast %7 : vector<1x512xf32> to vector<8x512xf32>
    %9 = arith.addf %6, %8 : vector<8x512xf32>
    %10 = vector.extract_strided_slice %9 {offsets = [0, 0], sizes = [8, 128], strides = [1, 1]} : vector<8x512xf32> to vector<8x128xf32>
    %11 = arith.negf %10 : vector<8x128xf32>
    %12 = math.exp %11 : vector<8x128xf32>
    %cst_9 = arith.constant 1.000000e+00 : f32
    %13 = vector.broadcast %cst_9 : f32 to vector<8x128xf32>
    %14 = arith.addf %13, %12 : vector<8x128xf32>
    %15 = arith.divf %13, %14 : vector<8x128xf32>
    %16 = vector.extract_strided_slice %9 {offsets = [0, 128], sizes = [8, 128], strides = [1, 1]} : vector<8x512xf32> to vector<8x128xf32>
    %17 = arith.negf %16 : vector<8x128xf32>
    %18 = math.exp %17 : vector<8x128xf32>
    %cst_10 = arith.constant 1.000000e+00 : f32
    %19 = vector.broadcast %cst_10 : f32 to vector<8x128xf32>
    %20 = arith.addf %19, %18 : vector<8x128xf32>
    %21 = arith.divf %19, %20 : vector<8x128xf32>
    %22 = vector.extract_strided_slice %9 {offsets = [0, 256], sizes = [8, 128], strides = [1, 1]} : vector<8x512xf32> to vector<8x128xf32>
    %23 = arith.negf %22 : vector<8x128xf32>
    %24 = math.exp %23 : vector<8x128xf32>
    %cst_11 = arith.constant 1.000000e+00 : f32
    %25 = vector.broadcast %cst_11 : f32 to vector<8x128xf32>
    %26 = arith.addf %25, %24 : vector<8x128xf32>
    %27 = arith.divf %25, %26 : vector<8x128xf32>
    %28 = vector.extract_strided_slice %9 {offsets = [0, 384], sizes = [8, 128], strides = [1, 1]} : vector<8x512xf32> to vector<8x128xf32>
    %29 = math.tanh %28 : vector<8x128xf32>
    %c0_12 = arith.constant 0 : index
    %c0_13 = arith.constant 0 : index
    %30 = vector.load %arg3[%c0_12, %c0_13] : memref<8x128xf32, #tpu.memory_space<vmem>>, vector<8x128xf32>
    %31 = arith.mulf %30, %21 : vector<8x128xf32>
    %32 = arith.mulf %29, %15 : vector<8x128xf32>
    %33 = arith.addf %31, %32 : vector<8x128xf32>
    %34 = math.tanh %33 : vector<8x128xf32>
    %35 = arith.mulf %34, %27 : vector<8x128xf32>
    %c0_14 = arith.constant 0 : index
    %c0_15 = arith.constant 0 : index
    %36 = vector.load %arg6[%c0_14, %c0_15] : memref<8x128xf32, #tpu.memory_space<vmem>>, vector<8x128xf32>
    tpu.vector_store %arg6[%c0_14, %c0_15], %35 {strides = array<i32>} : memref<8x128xf32, #tpu.memory_space<vmem>>, vector<8x128xf32>,
    %c0_16 = arith.constant 0 : index
    %c0_17 = arith.constant 0 : index
    %37 = vector.load %arg7[%c0_16, %c0_17] : memref<8x128xf32, #tpu.memory_space<vmem>>, vector<8x128xf32>
    tpu.vector_store %arg7[%c0_16, %c0_17], %33 {strides = array<i32>} : memref<8x128xf32, #tpu.memory_space<vmem>>, vector<8x128xf32>,
    return
  }
  func.func @transform_0(%arg0: i32) -> (i32, i32) {
    %c0_i32 = arith.constant 0 : i32
    %c0_i32_0 = arith.constant 0 : i32
    return %arg0, %c0_i32 : i32, i32
  }
  func.func @transform_1(%arg0: i32) -> (i32, i32) {
    %c0_i32 = arith.constant 0 : i32
    %c0_i32_0 = arith.constant 0 : i32
    return %arg0, %c0_i32 : i32, i32
  }
  func.func @transform_2(%arg0: i32) -> (i32, i32) {
    %c0_i32 = arith.constant 0 : i32
    %c0_i32_0 = arith.constant 0 : i32
    return %arg0, %c0_i32 : i32, i32
  }
  func.func @transform_3(%arg0: i32) -> (i32, i32) {
    %c0_i32 = arith.constant 0 : i32
    %c0_i32_0 = arith.constant 0 : i32
    %c0_i32_1 = arith.constant 0 : i32
    return %c0_i32, %c0_i32_0 : i32, i32
  }
  func.func @transform_4(%arg0: i32) -> (i32, i32) {
    %c0_i32 = arith.constant 0 : i32
    %c0_i32_0 = arith.constant 0 : i32
    %c0_i32_1 = arith.constant 0 : i32
    return %c0_i32, %c0_i32_0 : i32, i32
  }
  func.func @transform_5(%arg0: i32) -> (i32, i32) {
    %c0_i32 = arith.constant 0 : i32
    %c0_i32_0 = arith.constant 0 : i32
    return %arg0, %c0_i32 : i32, i32
  }
  func.func @transform_6(%arg0: i32) -> (i32, i32) {
    %c0_i32 = arith.constant 0 : i32
    %c0_i32_0 = arith.constant 0 : i32
    return %arg0, %c0_i32 : i32, i32
  }
}

</mosaic_0001>

<llo_original>
// kernel: tpu_custom_call.1
$region0: #{tpu_custom_call.1}
  #allocation0 [shape = 'u32[]', space=smem, size = 0x4, offset = 0x4, fixed_abs, tag = 'smem constant byte address 0x4 - core index']
  #allocation1 [shape = 'u32[144,128]{1,0:T(1,128)}', space=vmem, size = 0x12000, scoped, tag = 'internal scratch']
  %s0 = inlined_call_operand.hbm [shape: f32[8,128], index: 0, kind: input, shape index: {}]
  %s1 = inlined_call_operand.hbm [shape: f32[8,128], index: 1, kind: input, shape index: {}]
  %s2 = inlined_call_operand.hbm [shape: f32[8,128], index: 2, kind: input, shape index: {}]
  %s3 = inlined_call_operand.hbm [shape: f32[256,512], index: 3, kind: input, shape index: {}]
  %s4 = inlined_call_operand.vmem [shape: f32[1,512], index: 4, kind: input, shape index: {}]
  %s5 = inlined_call_operand.hbm [shape: f32[8,128], index: 5, kind: output, shape index: {0}]
  %s6 = inlined_call_operand.hbm [shape: f32[8,128], index: 6, kind: output, shape index: {1}]
  %7 = xla_tuple %s5, %s6
  %s8 = sld [smem:[#allocation0]]
  $region54: #{tpu_custom_call.1} parent=0
    _
  %s10 = ssub.s32 1, %s8
  %s11 = scalar_select 0, %s10, %s8
  $region1: #{tpu_custom_call.1} parent=0
    #allocation2 [shape = 'u8[4096]{0}', space=vmem, size = 0x1000, scoped, tag = 'input window, operand 0, single buffered']
    #allocation3 [shape = 's32[1]{0}', space=sflag, size = 0x4, scoped, tag = 'scoped memory for tpu_custom_call.1']
    #allocation4 [shape = 's32[1]{0}', space=sflag, size = 0x4, scoped, tag = 'scoped memory for tpu_custom_call.1']
    #allocation5 [shape = 'u8[4096]{0}', space=vmem, size = 0x1000, scoped, tag = 'input window, operand 1, single buffered']
    #allocation6 [shape = 's32[1]{0}', space=sflag, size = 0x4, scoped, tag = 'scoped memory for tpu_custom_call.1']
    #allocation7 [shape = 'u8[4096]{0}', space=vmem, size = 0x1000, scoped, tag = 'input window, operand 2, single buffered']
    #allocation8 [shape = 'u8[524288]{0}', space=vmem, size = 0x80000, scoped, tag = 'input window, operand 3, single buffered']
    #allocation9 [shape = 's32[1]{0}', space=sflag, size = 0x4, scoped, tag = 'scoped memory for tpu_custom_call.1']
    #allocation10 [shape = 'u8[4096]{0}', space=vmem, size = 0x1000, scoped, tag = 'output window, operand 0, single buffered']
    #allocation11 [shape = 'u8[4096]{0}', space=vmem, size = 0x1000, scoped, tag = 'output window, operand 1, single buffered']
    #allocation12 [shape = 's32[1]{0}', space=sflag, size = 0x4, scoped, tag = 'scoped memory for tpu_custom_call.1']
    %12 = vsyncpa [#allocation3], 0
    %13 = vsyncpa [#allocation6], 0
    %14 = vsyncpa [#allocation9], 0
    %15 = vsyncpa [#allocation4], 0
    %16 = vsyncpa [#allocation12], 0
    // Predicated region
    $region2: #{tpu_custom_call.1} parent=1 // pred_check
      _
    $region3: #{tpu_custom_call.1} parent=1 // pred_check_branch
      %18 = sbr.rel (0) target = $region5
    $region4: #{tpu_custom_call.1} parent=1 // pred_region
      %s20 = ssub.s32 128, 128
      %21 = vsyncadd [#allocation3], %s20
      %s23 = sshll.u32 [#allocation2], 4
      %s24 = int_to_ptr.vmem [resolvable:$true] %s23
      %26 = dma.hbm_to_vmem [thread:$0]  %s0, 128, %s24, [#allocation3]
    $region5: #{tpu_custom_call.1} parent=1 // pred_fallthru
      _
    // Predicated region
    $region6: #{tpu_custom_call.1} parent=1 // pred_check
      _
    $region7: #{tpu_custom_call.1} parent=1 // pred_check_branch
      %28 = sbr.rel (0) target = $region9
    $region8: #{tpu_custom_call.1} parent=1 // pred_region
      %s30 = ssub.s32 128, 128
      %31 = vsyncadd [#allocation6], %s30
      %s33 = sshll.u32 [#allocation5], 4
      %s34 = int_to_ptr.vmem [resolvable:$true] %s33
      %36 = dma.hbm_to_vmem [thread:$0]  %s1, 128, %s34, [#allocation6]
    $region9: #{tpu_custom_call.1} parent=1 // pred_fallthru
      _
    // Predicated region
    $region10: #{tpu_custom_call.1} parent=1 // pred_check
      _
    $region11: #{tpu_custom_call.1} parent=1 // pred_check_branch
      %38 = sbr.rel (0) target = $region13
    $region12: #{tpu_custom_call.1} parent=1 // pred_region
      %s40 = ssub.s32 128, 128
      %41 = vsyncadd [#allocation6], %s40
      %s43 = sshll.u32 [#allocation7], 4
      %s44 = int_to_ptr.vmem [resolvable:$true] %s43
      %46 = dma.hbm_to_vmem [thread:$0]  %s2, 128, %s44, [#allocation6]
    $region13: #{tpu_custom_call.1} parent=1 // pred_fallthru
      _
    // Predicated region
    $region14: #{tpu_custom_call.1} parent=1 // pred_check
      _
    $region15: #{tpu_custom_call.1} parent=1 // pred_check_branch
      %48 = sbr.rel (0) target = $region17
    $region16: #{tpu_custom_call.1} parent=1 // pred_region
      %s50 = ssub.s32 16384, 16384
      %51 = vsyncadd [#allocation9], %s50
      %s52 = sshll.u32 [#allocation8], 4
      %s53 = int_to_ptr.vmem [resolvable:$true] %s52
      %58 = dma.hbm_to_vmem [thread:$0]  %s3, 16384, %s53, [#allocation9], 512, 512, 32
    $region17: #{tpu_custom_call.1} parent=1 // pred_fallthru
      _
    // Predicated region
    $region18: #{tpu_custom_call.1} parent=1 // pred_check
      _
    $region19: #{tpu_custom_call.1} parent=1 // pred_check_branch
      %60 = sbr.rel (0) target = $region21
    $region20: #{tpu_custom_call.1} parent=1 // pred_region
      _
    $region21: #{tpu_custom_call.1} parent=1 // pred_fallthru
      _
    // Predicated region
    $region22: #{tpu_custom_call.1} parent=1 // pred_check
      _
    $region23: #{tpu_custom_call.1} parent=1 // pred_check_branch
      %62 = sbr.rel (0) target = $region25
    $region24: #{tpu_custom_call.1} parent=1 // pred_region
      %63 = dma.done [#allocation3], 128
    $region25: #{tpu_custom_call.1} parent=1 // pred_fallthru
      _
    // Predicated region
    $region26: #{tpu_custom_call.1} parent=1 // pred_check
      _
    $region27: #{tpu_custom_call.1} parent=1 // pred_check_branch
      %65 = sbr.rel (0) target = $region29
    $region28: #{tpu_custom_call.1} parent=1 // pred_region
      %66 = dma.done [#allocation6], 128
    $region29: #{tpu_custom_call.1} parent=1 // pred_fallthru
      _
    // Predicated region
    $region30: #{tpu_custom_call.1} parent=1 // pred_check
      _
    $region31: #{tpu_custom_call.1} parent=1 // pred_check_branch
      %68 = sbr.rel (0) target = $region33
    $region32: #{tpu_custom_call.1} parent=1 // pred_region
      %69 = dma.done [#allocation6], 128
    $region33: #{tpu_custom_call.1} parent=1 // pred_fallthru
      _
    // Predicated region
    $region34: #{tpu_custom_call.1} parent=1 // pred_check
      _
    $region35: #{tpu_custom_call.1} parent=1 // pred_check_branch
      %71 = sbr.rel (0) target = $region37
    $region36: #{tpu_custom_call.1} parent=1 // pred_region
      %72 = dma.done [#allocation9], 16384
    $region37: #{tpu_custom_call.1} parent=1 // pred_fallthru
      _
    %v73 = vld [vmem:[#allocation2] sm:$0xff]
    %v74 = vld [vmem:[#allocation8] sm:$0xff]
    %v75 = vld [vmem:[#allocation8 + $0x8] sm:$0xff]
    %v76 = vld [vmem:[#allocation8 + $0x10] sm:$0xff]
    %v77 = vld [vmem:[#allocation8 + $0x18] sm:$0xff]
    %v78 = vld [vmem:[#allocation8 + $0x20] sm:$0xff]
    %v79 = vld [vmem:[#allocation8 + $0x28] sm:$0xff]
    %v80 = vld [vmem:[#allocation8 + $0x30] sm:$0xff]
    %v81 = vld [vmem:[#allocation8 + $0x38] sm:$0xff]
    %v82 = vld [vmem:[#allocation8 + $0x40] sm:$0xff]
    %v83 = vld [vmem:[#allocation8 + $0x48] sm:$0xff]
    %v84 = vld [vmem:[#allocation8 + $0x50] sm:$0xff]
    %v85 = vld [vmem:[#allocation8 + $0x58] sm:$0xff]
    %v86 = vld [vmem:[#allocation8 + $0x60] sm:$0xff]
    %v87 = vld [vmem:[#allocation8 + $0x68] sm:$0xff]
    %v88 = vld [vmem:[#allocation8 + $0x70] sm:$0xff]
    %v89 = vld [vmem:[#allocation8 + $0x78] sm:$0xff]
    %v90 = vld [vmem:[#allocation8 + $0x80] sm:$0xff]
    %v91 = vld [vmem:[#allocation8 + $0x88] sm:$0xff]
    %v92 = vld [vmem:[#allocation8 + $0x90] sm:$0xff]
    %v93 = vld [vmem:[#allocation8 + $0x98] sm:$0xff]
    %v94 = vld [vmem:[#allocation8 + $0xa0] sm:$0xff]
    %v95 = vld [vmem:[#allocation8 + $0xa8] sm:$0xff]
    %v96 = vld [vmem:[#allocation8 + $0xb0] sm:$0xff]
    %v97 = vld [vmem:[#allocation8 + $0xb8] sm:$0xff]
    %v98 = vld [vmem:[#allocation8 + $0xc0] sm:$0xff]
    %v99 = vld [vmem:[#allocation8 + $0xc8] sm:$0xff]
    %v100 = vld [vmem:[#allocation8 + $0xd0] sm:$0xff]
    %v101 = vld [vmem:[#allocation8 + $0xd8] sm:$0xff]
    %v102 = vld [vmem:[#allocation8 + $0xe0] sm:$0xff]
    %v103 = vld [vmem:[#allocation8 + $0xe8] sm:$0xff]
    %v104 = vld [vmem:[#allocation8 + $0xf0] sm:$0xff]
    %v105 = vld [vmem:[#allocation8 + $0xf8] sm:$0xff]
    %v106 = vld [vmem:[#allocation8 + $0x100] sm:$0xff]
    %v107 = vld [vmem:[#allocation8 + $0x108] sm:$0xff]
    %v108 = vld [vmem:[#allocation8 + $0x110] sm:$0xff]
    %v109 = vld [vmem:[#allocation8 + $0x118] sm:$0xff]
    %v110 = vld [vmem:[#allocation8 + $0x120] sm:$0xff]
    %v111 = vld [vmem:[#allocation8 + $0x128] sm:$0xff]
    %v112 = vld [vmem:[#allocation8 + $0x130] sm:$0xff]
    %v113 = vld [vmem:[#allocation8 + $0x138] sm:$0xff]
    %v114 = vld [vmem:[#allocation8 + $0x140] sm:$0xff]
    %v115 = vld [vmem:[#allocation8 + $0x148] sm:$0xff]
    %v116 = vld [vmem:[#allocation8 + $0x150] sm:$0xff]
    %v117 = vld [vmem:[#allocation8 + $0x158] sm:$0xff]
    %v118 = vld [vmem:[#allocation8 + $0x160] sm:$0xff]
    %v119 = vld [vmem:[#allocation8 + $0x168] sm:$0xff]
    %v120 = vld [vmem:[#allocation8 + $0x170] sm:$0xff]
    %v121 = vld [vmem:[#allocation8 + $0x178] sm:$0xff]
    %v122 = vld [vmem:[#allocation8 + $0x180] sm:$0xff]
    %v123 = vld [vmem:[#allocation8 + $0x188] sm:$0xff]
    %v124 = vld [vmem:[#allocation8 + $0x190] sm:$0xff]
    %v125 = vld [vmem:[#allocation8 + $0x198] sm:$0xff]
    %v126 = vld [vmem:[#allocation8 + $0x1a0] sm:$0xff]
    %v127 = vld [vmem:[#allocation8 + $0x1a8] sm:$0xff]
    %v128 = vld [vmem:[#allocation8 + $0x1b0] sm:$0xff]
    %v129 = vld [vmem:[#allocation8 + $0x1b8] sm:$0xff]
    %v130 = vld [vmem:[#allocation8 + $0x1c0] sm:$0xff]
    %v131 = vld [vmem:[#allocation8 + $0x1c8] sm:$0xff]
    %v132 = vld [vmem:[#allocation8 + $0x1d0] sm:$0xff]
    %v133 = vld [vmem:[#allocation8 + $0x1d8] sm:$0xff]
    %v134 = vld [vmem:[#allocation8 + $0x1e0] sm:$0xff]
    %v135 = vld [vmem:[#allocation8 + $0x1e8] sm:$0xff]
    %v136 = vld [vmem:[#allocation8 + $0x1f0] sm:$0xff]
    %v137 = vld [vmem:[#allocation8 + $0x1f8] sm:$0xff]
    %v138 = vld [vmem:[#allocation5] sm:$0xff]
    %v139 = vld [vmem:[#allocation8 + $0x200] sm:$0xff]
    %v140 = vld [vmem:[#allocation8 + $0x208] sm:$0xff]
    %v141 = vld [vmem:[#allocation8 + $0x210] sm:$0xff]
    %v142 = vld [vmem:[#allocation8 + $0x218] sm:$0xff]
    %v143 = vld [vmem:[#allocation8 + $0x220] sm:$0xff]
    %v144 = vld [vmem:[#allocation8 + $0x228] sm:$0xff]
    %v145 = vld [vmem:[#allocation8 + $0x230] sm:$0xff]
    %v146 = vld [vmem:[#allocation8 + $0x238] sm:$0xff]
    %v147 = vld [vmem:[#allocation8 + $0x240] sm:$0xff]
    %v148 = vld [vmem:[#allocation8 + $0x248] sm:$0xff]
    %v149 = vld [vmem:[#allocation8 + $0x250] sm:$0xff]
    %v150 = vld [vmem:[#allocation8 + $0x258] sm:$0xff]
    %v151 = vld [vmem:[#allocation8 + $0x260] sm:$0xff]
    %v152 = vld [vmem:[#allocation8 + $0x268] sm:$0xff]
    %v153 = vld [vmem:[#allocation8 + $0x270] sm:$0xff]
    %v154 = vld [vmem:[#allocation8 + $0x278] sm:$0xff]
    %v155 = vld [vmem:[#allocation8 + $0x280] sm:$0xff]
    %v156 = vld [vmem:[#allocation8 + $0x288] sm:$0xff]
    %v157 = vld [vmem:[#allocation8 + $0x290] sm:$0xff]
    %v158 = vld [vmem:[#allocation8 + $0x298] sm:$0xff]
    %v159 = vld [vmem:[#allocation8 + $0x2a0] sm:$0xff]
    %v160 = vld [vmem:[#allocation8 + $0x2a8] sm:$0xff]
    %v161 = vld [vmem:[#allocation8 + $0x2b0] sm:$0xff]
    %v162 = vld [vmem:[#allocation8 + $0x2b8] sm:$0xff]
    %v163 = vld [vmem:[#allocation8 + $0x2c0] sm:$0xff]
    %v164 = vld [vmem:[#allocation8 + $0x2c8] sm:$0xff]
    %v165 = vld [vmem:[#allocation8 + $0x2d0] sm:$0xff]
    %v166 = vld [vmem:[#allocation8 + $0x2d8] sm:$0xff]
    %v167 = vld [vmem:[#allocation8 + $0x2e0] sm:$0xff]
    %v168 = vld [vmem:[#allocation8 + $0x2e8] sm:$0xff]
    %v169 = vld [vmem:[#allocation8 + $0x2f0] sm:$0xff]
    %v170 = vld [vmem:[#allocation8 + $0x2f8] sm:$0xff]
    %v171 = vld [vmem:[#allocation8 + $0x300] sm:$0xff]
    %v172 = vld [vmem:[#allocation8 + $0x308] sm:$0xff]
    %v173 = vld [vmem:[#allocation8 + $0x310] sm:$0xff]
    %v174 = vld [vmem:[#allocation8 + $0x318] sm:$0xff]
    %v175 = vld [vmem:[#allocation8 + $0x320] sm:$0xff]
    %v176 = vld [vmem:[#allocation8 + $0x328] sm:$0xff]
    %v177 = vld [vmem:[#allocation8 + $0x330] sm:$0xff]
    %v178 = vld [vmem:[#allocation8 + $0x338] sm:$0xff]
    %v179 = vld [vmem:[#allocation8 + $0x340] sm:$0xff]
    %v180 = vld [vmem:[#allocation8 + $0x348] sm:$0xff]
    %v181 = vld [vmem:[#allocation8 + $0x350] sm:$0xff]
    %v182 = vld [vmem:[#allocation8 + $0x358] sm:$0xff]
    %v183 = vld [vmem:[#allocation8 + $0x360] sm:$0xff]
    %v184 = vld [vmem:[#allocation8 + $0x368] sm:$0xff]
    %v185 = vld [vmem:[#allocation8 + $0x370] sm:$0xff]
    %v186 = vld [vmem:[#allocation8 + $0x378] sm:$0xff]
    %v187 = vld [vmem:[#allocation8 + $0x380] sm:$0xff]
    %v188 = vld [vmem:[#allocation8 + $0x388] sm:$0xff]
    %v189 = vld [vmem:[#allocation8 + $0x390] sm:$0xff]
    %v190 = vld [vmem:[#allocation8 + $0x398] sm:$0xff]
    %v191 = vld [vmem:[#allocation8 + $0x3a0] sm:$0xff]
    %v192 = vld [vmem:[#allocation8 + $0x3a8] sm:$0xff]
    %v193 = vld [vmem:[#allocation8 + $0x3b0] sm:$0xff]
    %v194 = vld [vmem:[#allocation8 + $0x3b8] sm:$0xff]
    %v195 = vld [vmem:[#allocation8 + $0x3c0] sm:$0xff]
    %v196 = vld [vmem:[#allocation8 + $0x3c8] sm:$0xff]
    %v197 = vld [vmem:[#allocation8 + $0x3d0] sm:$0xff]
    %v198 = vld [vmem:[#allocation8 + $0x3d8] sm:$0xff]
    %v199 = vld [vmem:[#allocation8 + $0x3e0] sm:$0xff]
    %v200 = vld [vmem:[#allocation8 + $0x3e8] sm:$0xff]
    %v201 = vld [vmem:[#allocation8 + $0x3f0] sm:$0xff]
    %v202 = vld [vmem:[#allocation8 + $0x3f8] sm:$0xff]
    %203 = vmatprep.subr.mxu0 %v140
    %204 = vmatpush1.msra.mxu0 %v139
    %205 = vmatprep.subr.mxu0 %v144
    %206 = vmatpush1.msra.mxu0 %v143
    %207 = vmatprep.subr.mxu0 %v148
    %208 = vmatpush1.msra.mxu0 %v147
    %209 = vmatprep.subr.mxu0 %v152
    %210 = vmatpush1.msra.mxu0 %v151
    %211 = vmatprep.subr.mxu0 %v156
    %212 = vmatpush1.msra.mxu0 %v155
    %213 = vmatprep.subr.mxu0 %v160
    %214 = vmatpush1.msra.mxu0 %v159
    %215 = vmatprep.subr.mxu0 %v164
    %216 = vmatpush1.msra.mxu0 %v163
    %217 = vmatprep.subr.mxu0 %v168
    %218 = vmatpush1.msra.mxu0 %v167
    %219 = vmatprep.subr.mxu0 %v172
    %220 = vmatpush1.msra.mxu0 %v171
    %221 = vmatprep.subr.mxu0 %v176
    %222 = vmatpush1.msra.mxu0 %v175
    %223 = vmatprep.subr.mxu0 %v180
    %224 = vmatpush1.msra.mxu0 %v179
    %225 = vmatprep.subr.mxu0 %v184
    %226 = vmatpush1.msra.mxu0 %v183
    %227 = vmatprep.subr.mxu0 %v188
    %228 = vmatpush1.msra.mxu0 %v187
    %229 = vmatprep.subr.mxu0 %v192
    %230 = vmatpush1.msra.mxu0 %v191
    %231 = vmatprep.subr.mxu0 %v196
    %232 = vmatpush1.msra.mxu0 %v195
    %233 = vmatprep.subr.mxu0 %v200
    %234 = vmatpush1.msra.mxu0 %v199
    %235 = vmatprep.subr.mxu0 0.0
    %236 = vmatpush1.msra.mxu0 0.0
    %237 = vmatprep.subr.mxu0 0.0
    %238 = vmatpush1.msra.mxu0 0.0
    %239 = vmatprep.subr.mxu0 0.0
    %240 = vmatpush1.msra.mxu0 0.0
    %241 = vmatprep.subr.mxu0 0.0
    %242 = vmatpush1.msra.mxu0 0.0
    %243 = vmatprep.subr.mxu0 0.0
    %244 = vmatpush1.msra.mxu0 0.0
    %245 = vmatprep.subr.mxu0 0.0
    %246 = vmatpush1.msra.mxu0 0.0
    %247 = vmatprep.subr.mxu0 0.0
    %248 = vmatpush1.msra.mxu0 0.0
    %249 = vmatprep.subr.mxu0 0.0
    %250 = vmatpush1.msra.mxu0 0.0
    %251 = vmatprep.subr.mxu0 0.0
    %252 = vmatpush1.msra.mxu0 0.0
    %253 = vmatprep.subr.mxu0 0.0
    %254 = vmatpush1.msra.mxu0 0.0
    %255 = vmatprep.subr.mxu0 0.0
    %256 = vmatpush1.msra.mxu0 0.0
    %257 = vmatprep.subr.mxu0 0.0
    %258 = vmatpush1.msra.mxu0 0.0
    %259 = vmatprep.subr.mxu0 0.0
    %260 = vmatpush1.msra.mxu0 0.0
    %261 = vmatprep.subr.mxu0 0.0
    %262 = vmatpush1.msra.mxu0 0.0
    %263 = vmatprep.subr.mxu0 0.0
    %264 = vmatpush1.msra.mxu0 0.0
    %265 = vmatprep.subr.mxu0 0.0
    %266 = vmatpush1.msra.mxu0 0.0
    %267 = vmatprep.mubr.f32.mxu0 0.0
    %268 = vmatmul.mubr.f32.gmra.mrb[0].mxu0 %v138
    %v269 = vpop.f32.mrb[0].mxu0
    %v270 = vadd.f32 0.0, %v269
    %v271 = vpop.f32.mrb[0].mxu0
    %v272 = vadd.f32 0.0, %v271
    %273 = vdwg.mxu0
    %274 = vmatprep.subr.mxu0 %v142
    %275 = vmatpush1.msra.mxu0 %v141
    %276 = vmatprep.subr.mxu0 %v146
    %277 = vmatpush1.msra.mxu0 %v145
    %278 = vmatprep.subr.mxu0 %v150
    %279 = vmatpush1.msra.mxu0 %v149
    %280 = vmatprep.subr.mxu0 %v154
    %281 = vmatpush1.msra.mxu0 %v153
    %282 = vmatprep.subr.mxu0 %v158
    %283 = vmatpush1.msra.mxu0 %v157
    %284 = vmatprep.subr.mxu0 %v162
    %285 = vmatpush1.msra.mxu0 %v161
    %286 = vmatprep.subr.mxu0 %v166
    %287 = vmatpush1.msra.mxu0 %v165
    %288 = vmatprep.subr.mxu0 %v170
    %289 = vmatpush1.msra.mxu0 %v169
    %290 = vmatprep.subr.mxu0 %v174
    %291 = vmatpush1.msra.mxu0 %v173
    %292 = vmatprep.subr.mxu0 %v178
    %293 = vmatpush1.msra.mxu0 %v177
    %294 = vmatprep.subr.mxu0 %v182
    %295 = vmatpush1.msra.mxu0 %v181
    %296 = vmatprep.subr.mxu0 %v186
    %297 = vmatpush1.msra.mxu0 %v185
    %298 = vmatprep.subr.mxu0 %v190
    %299 = vmatpush1.msra.mxu0 %v189
    %300 = vmatprep.subr.mxu0 %v194
    %301 = vmatpush1.msra.mxu0 %v193
    %302 = vmatprep.subr.mxu0 %v198
    %303 = vmatpush1.msra.mxu0 %v197
    %304 = vmatprep.subr.mxu0 %v202
    %305 = vmatpush1.msra.mxu0 %v201
    %306 = vmatprep.subr.mxu0 0.0
    %307 = vmatpush1.msra.mxu0 0.0
    %308 = vmatprep.subr.mxu0 0.0
    %309 = vmatpush1.msra.mxu0 0.0
    %310 = vmatprep.subr.mxu0 0.0
    %311 = vmatpush1.msra.mxu0 0.0
    %312 = vmatprep.subr.mxu0 0.0
    %313 = vmatpush1.msra.mxu0 0.0
    %314 = vmatprep.subr.mxu0 0.0
    %315 = vmatpush1.msra.mxu0 0.0
    %316 = vmatprep.subr.mxu0 0.0
    %317 = vmatpush1.msra.mxu0 0.0
    %318 = vmatprep.subr.mxu0 0.0
    %319 = vmatpush1.msra.mxu0 0.0
    %320 = vmatprep.subr.mxu0 0.0
    %321 = vmatpush1.msra.mxu0 0.0
    %322 = vmatprep.subr.mxu0 0.0
    %323 = vmatpush1.msra.mxu0 0.0
    %324 = vmatprep.subr.mxu0 0.0
    %325 = vmatpush1.msra.mxu0 0.0
    %326 = vmatprep.subr.mxu0 0.0
    %327 = vmatpush1.msra.mxu0 0.0
    %328 = vmatprep.subr.mxu0 0.0
    %329 = vmatpush1.msra.mxu0 0.0
    %330 = vmatprep.subr.mxu0 0.0
    %331 = vmatpush1.msra.mxu0 0.0
    %332 = vmatprep.subr.mxu0 0.0
    %333 = vmatpush1.msra.mxu0 0.0
    %334 = vmatprep.subr.mxu0 0.0
    %335 = vmatpush1.msra.mxu0 0.0
    %336 = vmatprep.subr.mxu0 0.0
    %337 = vmatpush1.msra.mxu0 0.0
    %338 = vmatprep.mubr.f32.mxu0 0.0
    %339 = vmatmul.mubr.f32.gmra.mrb[0].mxu0 %v138
    %v340 = vpop.f32.mrb[0].mxu0
    %v341 = vadd.f32 0.0, %v340
    %v342 = vpop.f32.mrb[0].mxu0
    %v343 = vadd.f32 0.0, %v342
    %344 = vdwg.mxu0
    %345 = vmatprep.subr.mxu0 %v75
    %346 = vmatpush1.msra.mxu0 %v74
    %347 = vmatprep.subr.mxu0 %v79
    %348 = vmatpush1.msra.mxu0 %v78
    %349 = vmatprep.subr.mxu0 %v83
    %350 = vmatpush1.msra.mxu0 %v82
    %351 = vmatprep.subr.mxu0 %v87
    %352 = vmatpush1.msra.mxu0 %v86
    %353 = vmatprep.subr.mxu0 %v91
    %354 = vmatpush1.msra.mxu0 %v90
    %355 = vmatprep.subr.mxu0 %v95
    %356 = vmatpush1.msra.mxu0 %v94
    %357 = vmatprep.subr.mxu0 %v99
    %358 = vmatpush1.msra.mxu0 %v98
    %359 = vmatprep.subr.mxu0 %v103
    %360 = vmatpush1.msra.mxu0 %v102
    %361 = vmatprep.subr.mxu0 %v107
    %362 = vmatpush1.msra.mxu0 %v106
    %363 = vmatprep.subr.mxu0 %v111
    %364 = vmatpush1.msra.mxu0 %v110
    %365 = vmatprep.subr.mxu0 %v115
    %366 = vmatpush1.msra.mxu0 %v114
    %367 = vmatprep.subr.mxu0 %v119
    %368 = vmatpush1.msra.mxu0 %v118
    %369 = vmatprep.subr.mxu0 %v123
    %370 = vmatpush1.msra.mxu0 %v122
    %371 = vmatprep.subr.mxu0 %v127
    %372 = vmatpush1.msra.mxu0 %v126
    %373 = vmatprep.subr.mxu0 %v131
    %374 = vmatpush1.msra.mxu0 %v130
    %375 = vmatprep.subr.mxu0 %v135
    %376 = vmatpush1.msra.mxu0 %v134
    %377 = vmatprep.subr.mxu0 0.0
    %378 = vmatpush1.msra.mxu0 0.0
    %379 = vmatprep.subr.mxu0 0.0
    %380 = vmatpush1.msra.mxu0 0.0
    %381 = vmatprep.subr.mxu0 0.0
    %382 = vmatpush1.msra.mxu0 0.0
    %383 = vmatprep.subr.mxu0 0.0
    %384 = vmatpush1.msra.mxu0 0.0
    %385 = vmatprep.subr.mxu0 0.0
    %386 = vmatpush1.msra.mxu0 0.0
    %387 = vmatprep.subr.mxu0 0.0
    %388 = vmatpush1.msra.mxu0 0.0
    %389 = vmatprep.subr.mxu0 0.0
    %390 = vmatpush1.msra.mxu0 0.0
    %391 = vmatprep.subr.mxu0 0.0
    %392 = vmatpush1.msra.mxu0 0.0
    %393 = vmatprep.subr.mxu0 0.0
    %394 = vmatpush1.msra.mxu0 0.0
    %395 = vmatprep.subr.mxu0 0.0
    %396 = vmatpush1.msra.mxu0 0.0
    %397 = vmatprep.subr.mxu0 0.0
    %398 = vmatpush1.msra.mxu0 0.0
    %399 = vmatprep.subr.mxu0 0.0
    %400 = vmatpush1.msra.mxu0 0.0
    %401 = vmatprep.subr.mxu0 0.0
    %402 = vmatpush1.msra.mxu0 0.0
    %403 = vmatprep.subr.mxu0 0.0
    %404 = vmatpush1.msra.mxu0 0.0
    %405 = vmatprep.subr.mxu0 0.0
    %406 = vmatpush1.msra.mxu0 0.0
    %407 = vmatprep.subr.mxu0 0.0
    %408 = vmatpush1.msra.mxu0 0.0
    %409 = vmatprep.mubr.f32.mxu0 0.0
    %410 = vmatmul.mubr.f32.gmra.mrb[0].mxu0 %v73
    %v411 = vpop.f32.mrb[0].mxu0
    %v412 = vadd.f32 %v270, %v411
    %v413 = vpop.f32.mrb[0].mxu0
    %v414 = vadd.f32 %v272, %v413
    %415 = vdwg.mxu0
    %416 = vmatprep.subr.mxu0 %v77
    %417 = vmatpush1.msra.mxu0 %v76
    %418 = vmatprep.subr.mxu0 %v81
    %419 = vmatpush1.msra.mxu0 %v80
    %420 = vmatprep.subr.mxu0 %v85
    %421 = vmatpush1.msra.mxu0 %v84
    %422 = vmatprep.subr.mxu0 %v89
    %423 = vmatpush1.msra.mxu0 %v88
    %424 = vmatprep.subr.mxu0 %v93
    %425 = vmatpush1.msra.mxu0 %v92
    %426 = vmatprep.subr.mxu0 %v97
    %427 = vmatpush1.msra.mxu0 %v96
    %428 = vmatprep.subr.mxu0 %v101
    %429 = vmatpush1.msra.mxu0 %v100
    %430 = vmatprep.subr.mxu0 %v105
    %431 = vmatpush1.msra.mxu0 %v104
    %432 = vmatprep.subr.mxu0 %v109
    %433 = vmatpush1.msra.mxu0 %v108
    %434 = vmatprep.subr.mxu0 %v113
    %435 = vmatpush1.msra.mxu0 %v112
    %436 = vmatprep.subr.mxu0 %v117
    %437 = vmatpush1.msra.mxu0 %v116
    %438 = vmatprep.subr.mxu0 %v121
    %439 = vmatpush1.msra.mxu0 %v120
    %440 = vmatprep.subr.mxu0 %v125
    %441 = vmatpush1.msra.mxu0 %v124
    %442 = vmatprep.subr.mxu0 %v129
    %443 = vmatpush1.msra.mxu0 %v128
    %444 = vmatprep.subr.mxu0 %v133
    %445 = vmatpush1.msra.mxu0 %v132
    %446 = vmatprep.subr.mxu0 %v137
    %447 = vmatpush1.msra.mxu0 %v136
    %448 = vmatprep.subr.mxu0 0.0
    %449 = vmatpush1.msra.mxu0 0.0
    %450 = vmatprep.subr.mxu0 0.0
    %451 = vmatpush1.msra.mxu0 0.0
    %452 = vmatprep.subr.mxu0 0.0
    %453 = vmatpush1.msra.mxu0 0.0
    %454 = vmatprep.subr.mxu0 0.0
    %455 = vmatpush1.msra.mxu0 0.0
    %456 = vmatprep.subr.mxu0 0.0
    %457 = vmatpush1.msra.mxu0 0.0
    %458 = vmatprep.subr.mxu0 0.0
    %459 = vmatpush1.msra.mxu0 0.0
    %460 = vmatprep.subr.mxu0 0.0
    %461 = vmatpush1.msra.mxu0 0.0
    %462 = vmatprep.subr.mxu0 0.0
    %463 = vmatpush1.msra.mxu0 0.0
    %464 = vmatprep.subr.mxu0 0.0
    %465 = vmatpush1.msra.mxu0 0.0
    %466 = vmatprep.subr.mxu0 0.0
    %467 = vmatpush1.msra.mxu0 0.0
    %468 = vmatprep.subr.mxu0 0.0
    %469 = vmatpush1.msra.mxu0 0.0
    %470 = vmatprep.subr.mxu0 0.0
    %471 = vmatpush1.msra.mxu0 0.0
    %472 = vmatprep.subr.mxu0 0.0
    %473 = vmatpush1.msra.mxu0 0.0
    %474 = vmatprep.subr.mxu0 0.0
    %475 = vmatpush1.msra.mxu0 0.0
    %476 = vmatprep.subr.mxu0 0.0
    %477 = vmatpush1.msra.mxu0 0.0
    %478 = vmatprep.subr.mxu0 0.0
    %479 = vmatpush1.msra.mxu0 0.0
    %480 = vmatprep.mubr.f32.mxu0 0.0
    %481 = vmatmul.mubr.f32.gmra.mrb[0].mxu0 %v73
    %v482 = vpop.f32.mrb[0].mxu0
    %v483 = vadd.f32 %v341, %v482
    %v484 = vpop.f32.mrb[0].mxu0
    %v485 = vadd.f32 %v343, %v484
    %486 = vdwg.mxu0
    %v487 = vld [vmem:[%s4] sm:$0xf]
    %v489 = vlaneseq
    %v490 = vshrl.u32 %v489, 7
    %v491 = vsub.s32 0, %v490
    %v492 = vrot.slane %v487, %v491
    %v493 = vlaneseq
    %v494 = vshrl.u32 %v493, 7
    %v495 = vsub.s32 1, %v494
    %v496 = vrot.slane %v487, %v495
    %v497 = vlaneseq
    %v498 = vshrl.u32 %v497, 7
    %v499 = vsub.s32 2, %v498
    %v500 = vrot.slane %v487, %v499
    %v501 = vlaneseq
    %v502 = vshrl.u32 %v501, 7
    %v503 = vsub.s32 3, %v502
    %v504 = vrot.slane %v487, %v503
    %v509 = vadd.f32 %v412, %v492
    %v510 = vadd.f32 %v414, %v496
    %v511 = vadd.f32 %v483, %v500
    %v512 = vadd.f32 %v485, %v504
    %v513 = vxor.u32 %v509, 2147483648
    %v514 = vmul.f32 %v513, 1.442695
    %v515 = vpow.pop %v514
    %v516 = vadd.f32 %v515, 1.0
    %v517 = vrcp.pop %v516
    %v518 = vmul.f32 1.0, %v517
    %v519 = vxor.u32 %v510, 2147483648
    %v520 = vmul.f32 %v519, 1.442695
    %v521 = vpow.pop %v520
    %v522 = vadd.f32 %v521, 1.0
    %v523 = vrcp.pop %v522
    %v524 = vmul.f32 1.0, %v523
    %v525 = vxor.u32 %v511, 2147483648
    %v526 = vmul.f32 %v525, 1.442695
    %v527 = vpow.pop %v526
    %v528 = vadd.f32 %v527, 1.0
    %v529 = vrcp.pop %v528
    %v530 = vmul.f32 1.0, %v529
    %v531 = vtanh.pop %v512
    %v532 = vld [vmem:[#allocation7] sm:$0xff]
    %v533 = vmul.f32 %v532, %v524
    %v534 = vmul.f32 %v531, %v518
    %v535 = vadd.f32 %v533, %v534
    %v536 = vtanh.pop %v535
    %v537 = vmul.f32 %v536, %v530
    %538 = vst [vmem:[#allocation10] sm:$0xff] %v537
    %539 = vst [vmem:[#allocation11] sm:$0xff] %v535
    // Predicated region
    $region38: #{tpu_custom_call.1} parent=1 // pred_check
      _
    $region39: #{tpu_custom_call.1} parent=1 // pred_check_branch
      %541 = sbr.rel (0) target = $region41
    $region40: #{tpu_custom_call.1} parent=1 // pred_region
      %s543 = ssub.s32 128, 128
      %544 = vsyncadd [#allocation4], %s543
      %s546 = sshll.u32 [#allocation10], 4
      %s547 = int_to_ptr.vmem [resolvable:$true] %s546
      %549 = dma.vmem_to_hbm [thread:$0]  %s547, 128, %s5, [#allocation4]
    $region41: #{tpu_custom_call.1} parent=1 // pred_fallthru
      _
    // Predicated region
    $region42: #{tpu_custom_call.1} parent=1 // pred_check
      _
    $region43: #{tpu_custom_call.1} parent=1 // pred_check_branch
      %551 = sbr.rel (0) target = $region45
    $region44: #{tpu_custom_call.1} parent=1 // pred_region
      %s553 = ssub.s32 128, 128
      %554 = vsyncadd [#allocation12], %s553
      %s556 = sshll.u32 [#allocation11], 4
      %s557 = int_to_ptr.vmem [resolvable:$true] %s556
      %559 = dma.vmem_to_hbm [thread:$0]  %s557, 128, %s6, [#allocation12]
    $region45: #{tpu_custom_call.1} parent=1 // pred_fallthru
      _
    // Predicated region
    $region46: #{tpu_custom_call.1} parent=1 // pred_check
      _
    $region47: #{tpu_custom_call.1} parent=1 // pred_check_branch
      %561 = sbr.rel (0) target = $region49
    $region48: #{tpu_custom_call.1} parent=1 // pred_region
      %562 = dma.done [#allocation4], 128
    $region49: #{tpu_custom_call.1} parent=1 // pred_fallthru
      _
    // Predicated region
    $region50: #{tpu_custom_call.1} parent=1 // pred_check
      _
    $region51: #{tpu_custom_call.1} parent=1 // pred_check_branch
      %564 = sbr.rel (0) target = $region53
    $region52: #{tpu_custom_call.1} parent=1 // pred_region
      %565 = dma.done [#allocation12], 128
    $region53: #{tpu_custom_call.1} parent=1 // pred_fallthru
      _
    %566 = vsyncpa [#allocation3], 1
    %567 = vsyncpa [#allocation6], 1
    %568 = vsyncpa [#allocation9], 1
    %569 = vsyncpa [#allocation4], 1
    %570 = vsyncpa [#allocation12], 1

</llo_original>
